<compile_context>
chip_gen: v7x
topology: tpu7x:2x2x1
jax: 0.10.0
libtpu: 0.0.40
codegen_flags: <defaults>
</compile_context>

<pallas_src>
import math

import jax
import jax.numpy as jnp
from jax import lax
from jax.experimental import pallas as pl
from jax.experimental.pallas import tpu as pltpu

# ----------------------------- config (small) -------------------------------
FC_INPUT = 32        # self.input_size
HIDDEN = 32          # self.hidden_size
MAX_ROW_TILE = 1024  # rows (flattened batch*seq) per grid step; multiple of 8


def _round_up(x, m):
    return ((x + m - 1) // m) * m


# ------------------------------ Pallas kernel -------------------------------
def _attention_layer_kernel(x_ref, w1_ref, b1_ref, w2c_ref, b2_ref, o_ref):
    """o = fc2(tanh(fc1(x))) on one row tile, transposed (rows-in-lanes) layout.

    x   : [TM, Din]   (as stored in HBM: rows in sublanes)
    w1  : [H, Din]    (PyTorch-native fc1.weight)
    b1  : [H, 1]
    w2c : [H, 1]      (fc2.weight as a column)
    b2  : [1]         (SMEM scalar)
    o   : [1, 1, TM]  (lane-dense score slab)
    """
    # fc1 as w1 @ x^T -> (H, TM): contract the last dim of both operands
    # (same dot_general pattern as flash-attention QK^T).  Rows land in lanes,
    # so every downstream vreg is fully dense.
    h = lax.dot_general(
        w1_ref[...], x_ref[...],
        dimension_numbers=(((1,), (1,)), ((), ())),
        preferred_element_type=jnp.float32,
    )
    t = jnp.tanh(h + b1_ref[...])                              # EUP tanh, dense lanes
    # fc2 has one output unit -> broadcast-multiply + sublane (XLU) reduce,
    # producing a lane-dense (1, TM) score row directly.
    s = jnp.sum(t * w2c_ref[...], axis=0, keepdims=True)       # (1, TM)
    o_ref[...] = (s + b2_ref[0])[None]                         # (1, 1, TM)


def attention_layer_forward(inputs, w1, b1, w2, b2, *, row_tile=MAX_ROW_TILE):
    """inputs: [..., fc_input] float32 -> [..., 1] float32."""
    orig_lead = inputs.shape[:-1]
    din = inputs.shape[-1]
    hidden = w1.shape[0]

    n = math.prod(orig_lead) if orig_lead else 1
    x2 = inputs.reshape(n, din)

    # Shrink the tile for tiny problems (bounded padding); keep it a multiple of 8.
    row_tile = max(8, min(row_tile, _round_up(n, 8)))
    row_tile = _round_up(row_tile, 8)
    n_pad = _round_up(n, row_tile)
    if n_pad != n:
        x2 = jnp.pad(x2, ((0, n_pad - n), (0, 0)))
    num_tiles = n_pad // row_tile

    b1_col = b1.reshape(hidden, 1)   # broadcast over lanes inside the kernel
    w2_col = w2.reshape(hidden, 1)   # fc2.weight as a column for the sublane reduce
    b2_vec = b2.reshape(1)           # SMEM scalar

    out = pl.pallas_call(
        _attention_layer_kernel,
        out_shape=jax.ShapeDtypeStruct((num_tiles, 1, row_tile), jnp.float32),
        grid=(num_tiles,),
        in_specs=[
            pl.BlockSpec((row_tile, din), lambda i: (i, 0)),     # x: tiled rows
            pl.BlockSpec((hidden, din), lambda i: (0, 0)),       # w1: VMEM-resident
            pl.BlockSpec((hidden, 1), lambda i: (0, 0)),         # b1: VMEM-resident
            pl.BlockSpec((hidden, 1), lambda i: (0, 0)),         # w2 column: resident
            pl.BlockSpec(memory_space=pltpu.MemorySpace.SMEM),   # b2: SMEM scalar
        ],
        out_specs=pl.BlockSpec((1, 1, row_tile), lambda i: (i, 0, 0)),
        compiler_params=pltpu.CompilerParams(
            dimension_semantics=("parallel",)),
    )(x2, w1, b1_col, w2_col, b2_vec)

    scores = out.reshape(n_pad)[:n]          # drop padded rows before reshaping back
    return scores.reshape(orig_lead + (1,))


# ------------------------------ parameter init ------------------------------
def init_params(key, fc_input=FC_INPUT, hidden=HIDDEN):
    """Xavier-uniform weights (as in xavier_init_fc), zero biases.

    Weights are kept in the native PyTorch layouts:
      fc1.weight: [hidden, fc_input], fc2.weight: [1, hidden].
    """
    k1, k2 = jax.random.split(key)
    r1 = math.sqrt(6.0) / math.sqrt(fc_input + hidden)
    r2 = math.sqrt(6.0) / math.sqrt(hidden + 1)
    w1 = jax.random.uniform(k1, (hidden, fc_input), jnp.float32, -r1, r1)
    b1 = jnp.zeros((hidden,), jnp.float32)
    w2 = jax.random.uniform(k2, (1, hidden), jnp.float32, -r2, r2)
    b2 = jnp.zeros((1,), jnp.float32)
    return w1, b1, w2, b2


# ----------------------------------- main ------------------------------------
if __name__ == "__main__":
    B, S = 2, 8
    key = jax.random.PRNGKey(0)
    k_x, k_p = jax.random.split(key)

    inputs = jax.random.normal(k_x, (B, S, FC_INPUT), dtype=jnp.float32)
    w1, b1, w2, b2 = init_params(k_p)

    out = attention_layer_forward(inputs, w1, b1, w2, b2)
    out = jax.block_until_ready(out)

    # Pure-JAX reference (PyTorch-native weight layouts).
    ref = jnp.tanh(inputs @ w1.T + b1) @ w2.T + b2            # [B, S, 1]

    assert out.shape == (B, S, 1)
    assert out.dtype == jnp.float32
    assert bool(jnp.all(jnp.isfinite(out)))
    assert bool(jnp.allclose(out, ref, atol=1e-5, rtol=1e-5))
    print("KERNEL_OK")
</pallas_src>

<mosaic_0001>
module attributes {stable_mosaic.version = 11 : i64} {
  func.func @_attention_layer_kernel(%arg0: i32, %arg1: memref<16x32xf32, #tpu.memory_space<vmem>>, %arg2: memref<32x32xf32, #tpu.memory_space<vmem>>, %arg3: memref<32x1xf32, #tpu.memory_space<vmem>>, %arg4: memref<32x1xf32, #tpu.memory_space<vmem>>, %arg5: memref<1xf32, #tpu.memory_space<smem>>, %arg6: memref<1x1x16xf32, #tpu.memory_space<vmem>>) attributes {dimension_semantics = [#tpu.dimension_semantics<parallel>], iteration_bounds = array<i64: 1>, scalar_prefetch = 0 : i64, scratch_operands = 0 : i64, tpu.core_type = #tpu.core_type<tc>, window_params = [{transform_indices = @transform_0, window_bounds = array<i64: 16, 32>}, {pipeline_mode = #tpu.pipeline_mode<synchronous>, transform_indices = @transform_1, window_bounds = array<i64: 32, 32>}, {pipeline_mode = #tpu.pipeline_mode<synchronous>, transform_indices = @transform_2, window_bounds = array<i64: 32, 1>}, {pipeline_mode = #tpu.pipeline_mode<synchronous>, transform_indices = @transform_3, window_bounds = array<i64: 32, 1>}, {transform_indices = @transform_4, window_bounds = array<i64: 1>}, {transform_indices = @transform_5, window_bounds = array<i64: 1, 1, 16>}]} {
    %c0 = arith.constant 0 : index
    %c0_0 = arith.constant 0 : index
    %0 = vector.load %arg2[%c0, %c0_0] : memref<32x32xf32, #tpu.memory_space<vmem>>, vector<32x32xf32>
    %c0_1 = arith.constant 0 : index
    %c0_2 = arith.constant 0 : index
    %1 = vector.load %arg1[%c0_1, %c0_2] : memref<16x32xf32, #tpu.memory_space<vmem>>, vector<16x32xf32>
    %cst = arith.constant dense<0.000000e+00> : vector<32x16xf32>
    %2 = tpu.matmul %0, %1, %cst {dimension_numbers = #tpu.dot_dimension_numbers<[1], [1], [0], [0], [0, 0, 1, 0], [], []>} : vector<32x32xf32>, vector<16x32xf32>, vector<32x16xf32> -> vector<32x16xf32>
    %c0_3 = arith.constant 0 : index
    %c0_4 = arith.constant 0 : index
    %3 = vector.load %arg3[%c0_3, %c0_4] : memref<32x1xf32, #tpu.memory_space<vmem>>, vector<32x1xf32>
    %4 = vector.broadcast %3 : vector<32x1xf32> to vector<32x16xf32>
    %5 = arith.addf %2, %4 : vector<32x16xf32>
    %6 = math.tanh %5 : vector<32x16xf32>
    %c0_5 = arith.constant 0 : index
    %c0_6 = arith.constant 0 : index
    %7 = vector.load %arg4[%c0_5, %c0_6] : memref<32x1xf32, #tpu.memory_space<vmem>>, vector<32x1xf32>
    %8 = vector.broadcast %7 : vector<32x1xf32> to vector<32x16xf32>
    %9 = arith.mulf %6, %8 : vector<32x16xf32>
    %cst_7 = arith.constant dense<0.000000e+00> : vector<16xf32>
    %10 = vector.multi_reduction <add>, %9, %cst_7 [0] : vector<32x16xf32> to vector<16xf32>
    %11 = vector.shape_cast %10 : vector<16xf32> to vector<1x16xf32>
    %c0_8 = arith.constant 0 : index
    %12 = memref.load %arg5[%c0_8] : memref<1xf32, #tpu.memory_space<smem>>
    %13 = vector.broadcast %12 : f32 to vector<1x16xf32>
    %14 = arith.addf %11, %13 : vector<1x16xf32>
    %15 = vector.shape_cast %14 : vector<1x16xf32> to vector<1x1x16xf32>
    %c0_9 = arith.constant 0 : index
    %c0_10 = arith.constant 0 : index
    %c0_11 = arith.constant 0 : index
    %16 = vector.load %arg6[%c0_9, %c0_10, %c0_11] : memref<1x1x16xf32, #tpu.memory_space<vmem>>, vector<1x1x16xf32>
    tpu.vector_store %arg6[%c0_9, %c0_10, %c0_11], %15 {strides = array<i32>} : memref<1x1x16xf32, #tpu.memory_space<vmem>>, vector<1x1x16xf32>,
    return
  }
  func.func @transform_0(%arg0: i32) -> (i32, i32) {
    %c0_i32 = arith.constant 0 : i32
    %c0_i32_0 = arith.constant 0 : i32
    return %arg0, %c0_i32 : i32, i32
  }
  func.func @transform_1(%arg0: i32) -> (i32, i32) {
    %c0_i32 = arith.constant 0 : i32
    %c0_i32_0 = arith.constant 0 : i32
    %c0_i32_1 = arith.constant 0 : i32
    return %c0_i32, %c0_i32_0 : i32, i32
  }
  func.func @transform_2(%arg0: i32) -> (i32, i32) {
    %c0_i32 = arith.constant 0 : i32
    %c0_i32_0 = arith.constant 0 : i32
    %c0_i32_1 = arith.constant 0 : i32
    return %c0_i32, %c0_i32_0 : i32, i32
  }
  func.func @transform_3(%arg0: i32) -> (i32, i32) {
    %c0_i32 = arith.constant 0 : i32
    %c0_i32_0 = arith.constant 0 : i32
    %c0_i32_1 = arith.constant 0 : i32
    return %c0_i32, %c0_i32_0 : i32, i32
  }
  func.func @transform_4(%arg0: i32) -> i32 {
    %c0_i32 = arith.constant 0 : i32
    %c0_i32_0 = arith.constant 0 : i32
    return %c0_i32 : i32
  }
  func.func @transform_5(%arg0: i32) -> (i32, i32, i32) {
    %c0_i32 = arith.constant 0 : i32
    %c0_i32_0 = arith.constant 0 : i32
    %c0_i32_1 = arith.constant 0 : i32
    return %arg0, %c0_i32, %c0_i32_0 : i32, i32, i32
  }
}

</mosaic_0001>

<llo_original>
// kernel: tpu_custom_call.1
$region0: #{tpu_custom_call.1}
  #allocation0 [shape = 'u32[]', space=smem, size = 0x4, offset = 0x4, fixed_abs, tag = 'smem constant byte address 0x4 - core index']
  #allocation1 [shape = 'u32[144,128]{1,0:T(1,128)}', space=vmem, size = 0x12000, scoped, tag = 'internal scratch']
  #allocation2 [shape = 'f32[1]{0:T(128)S(6)}', space=smem, size = 0x200, scoped, tag = 'scoped memory for tpu_custom_call.1']
  %s0 = inlined_call_operand.vmem [shape: f32[16,32], index: 0, kind: input, shape index: {}]
  %s1 = inlined_call_operand.vmem [shape: f32[32,32], index: 1, kind: input, shape index: {}]
  %s2 = inlined_call_operand.vmem [shape: f32[32,1], index: 2, kind: input, shape index: {}]
  %s3 = inlined_call_operand.vmem [shape: f32[32,1], index: 3, kind: input, shape index: {}]
  %s4 = inlined_call_operand.<no memory space> [shape: f32[1], index: 4, kind: input, shape index: {}]
  %s5 = inlined_call_operand.hbm [shape: f32[1,1,16], index: 5, kind: output, shape index: {}]
  %s6 = sld [smem:[#allocation0]]
  $region30: #{tpu_custom_call.1} parent=0
    _
  %s8 = ssub.s32 1, %s6
  %s9 = scalar_select 0, %s8, %s6
  %10 = sst [smem:[#allocation2]] %s4
  $region1: #{tpu_custom_call.1} parent=0
    #allocation3 [shape = 'u8[512]{0}', space=vmem, size = 0x400, scoped, tag = 'output window, operand 0, single buffered']
    #allocation4 [shape = 's32[1]{0}', space=sflag, size = 0x4, scoped, tag = 'scoped memory for tpu_custom_call.1']
    %11 = vsyncpa [#allocation4], 0
    // Predicated region
    $region2: #{tpu_custom_call.1} parent=1 // pred_check
      _
    $region3: #{tpu_custom_call.1} parent=1 // pred_check_branch
      %13 = sbr.rel (0) target = $region5
    $region4: #{tpu_custom_call.1} parent=1 // pred_region
      _
    $region5: #{tpu_custom_call.1} parent=1 // pred_fallthru
      _
    // Predicated region
    $region6: #{tpu_custom_call.1} parent=1 // pred_check
      _
    $region7: #{tpu_custom_call.1} parent=1 // pred_check_branch
      %15 = sbr.rel (0) target = $region9
    $region8: #{tpu_custom_call.1} parent=1 // pred_region
      _
    $region9: #{tpu_custom_call.1} parent=1 // pred_fallthru
      _
    // Predicated region
    $region10: #{tpu_custom_call.1} parent=1 // pred_check
      _
    $region11: #{tpu_custom_call.1} parent=1 // pred_check_branch
      %17 = sbr.rel (0) target = $region13
    $region12: #{tpu_custom_call.1} parent=1 // pred_region
      _
    $region13: #{tpu_custom_call.1} parent=1 // pred_fallthru
      _
    // Predicated region
    $region14: #{tpu_custom_call.1} parent=1 // pred_check
      _
    $region15: #{tpu_custom_call.1} parent=1 // pred_check_branch
      %19 = sbr.rel (0) target = $region17
    $region16: #{tpu_custom_call.1} parent=1 // pred_region
      _
    $region17: #{tpu_custom_call.1} parent=1 // pred_fallthru
      _
    // Predicated region
    $region18: #{tpu_custom_call.1} parent=1 // pred_check
      _
    $region19: #{tpu_custom_call.1} parent=1 // pred_check_branch
      %21 = sbr.rel (0) target = $region21
    $region20: #{tpu_custom_call.1} parent=1 // pred_region
      _
    $region21: #{tpu_custom_call.1} parent=1 // pred_fallthru
      _
    %v22 = vld [vmem:[%s1] sm:$0xff]
    %v23 = vld [vmem:[%s1 + $0x8] sm:$0xff]
    %v24 = vld [vmem:[%s1 + $0x10] sm:$0xff]
    %v25 = vld [vmem:[%s1 + $0x18] sm:$0xff]
    %v26 = vld [vmem:[%s0] sm:$0xff]
    %v27 = vld [vmem:[%s0 + $0x8] sm:$0xff]
    %v28 = vld [vmem:[%s2] sm:$0xff]
    %v29 = vld [vmem:[%s2 + $0x8] sm:$0xff]
    %v30 = vld [vmem:[%s2 + $0x10] sm:$0xff]
    %v31 = vld [vmem:[%s2 + $0x18] sm:$0xff]
    %33 = vset.pattern.permute.xlu0 0
    %34 = vperm.xlu0 %33, %v28
    %v35 = vpop.permute.xlu0 %34
    %38 = vset.pattern.permute.xlu0 0
    %39 = vperm.xlu0 %38, %v29
    %v40 = vpop.permute.xlu0 %39
    %43 = vset.pattern.permute.xlu0 0
    %44 = vperm.xlu0 %43, %v30
    %v45 = vpop.permute.xlu0 %44
    %48 = vset.pattern.permute.xlu0 0
    %49 = vperm.xlu0 %48, %v31
    %v50 = vpop.permute.xlu0 %49
    %vm52 = vcmask 261120
    %v54 = vsel %vm52, %v22, 0
    %v57 = vsel %vm52, %v23, 0
    %v60 = vsel %vm52, %v24, 0
    %v63 = vsel %vm52, %v25, 0
    %v66 = vsel %vm52, %v26, 0
    %v69 = vsel %vm52, %v27, 0
    %71 = vmatprep.subr.mxu0 0.0
    %72 = vmatpush1.xpose.msra.mxu0 %v66
    %73 = vmatprep.subr.mxu0 0.0
    %74 = vmatpush1.xpose.msra.mxu0 %v69
    %75 = vmatprep.subr.mxu0 0.0
    %76 = vmatpush1.xpose.msra.mxu0 0.0
    %77 = vmatprep.subr.mxu0 0.0
    %78 = vmatpush1.xpose.msra.mxu0 0.0
    %79 = vmatprep.subr.mxu0 0.0
    %80 = vmatpush1.xpose.msra.mxu0 0.0
    %81 = vmatprep.subr.mxu0 0.0
    %82 = vmatpush1.xpose.msra.mxu0 0.0
    %83 = vmatprep.subr.mxu0 0.0
    %84 = vmatpush1.xpose.msra.mxu0 0.0
    %85 = vmatprep.subr.mxu0 0.0
    %86 = vmatpush1.xpose.msra.mxu0 0.0
    %87 = vmatprep.subr.mxu0 0.0
    %88 = vmatpush1.xpose.msra.mxu0 0.0
    %89 = vmatprep.subr.mxu0 0.0
    %90 = vmatpush1.xpose.msra.mxu0 0.0
    %91 = vmatprep.subr.mxu0 0.0
    %92 = vmatpush1.xpose.msra.mxu0 0.0
    %93 = vmatprep.subr.mxu0 0.0
    %94 = vmatpush1.xpose.msra.mxu0 0.0
    %95 = vmatprep.subr.mxu0 0.0
    %96 = vmatpush1.xpose.msra.mxu0 0.0
    %97 = vmatprep.subr.mxu0 0.0
    %98 = vmatpush1.xpose.msra.mxu0 0.0
    %99 = vmatprep.subr.mxu0 0.0
    %100 = vmatpush1.xpose.msra.mxu0 0.0
    %101 = vmatprep.subr.mxu0 0.0
    %102 = vmatpush1.xpose.msra.mxu0 0.0
    %103 = vmatprep.subr.mxu0 0.0
    %104 = vmatpush1.xpose.msra.mxu0 0.0
    %105 = vmatprep.subr.mxu0 0.0
    %106 = vmatpush1.xpose.msra.mxu0 0.0
    %107 = vmatprep.subr.mxu0 0.0
    %108 = vmatpush1.xpose.msra.mxu0 0.0
    %109 = vmatprep.subr.mxu0 0.0
    %110 = vmatpush1.xpose.msra.mxu0 0.0
    %111 = vmatprep.subr.mxu0 0.0
    %112 = vmatpush1.xpose.msra.mxu0 0.0
    %113 = vmatprep.subr.mxu0 0.0
    %114 = vmatpush1.xpose.msra.mxu0 0.0
    %115 = vmatprep.subr.mxu0 0.0
    %116 = vmatpush1.xpose.msra.mxu0 0.0
    %117 = vmatprep.subr.mxu0 0.0
    %118 = vmatpush1.xpose.msra.mxu0 0.0
    %119 = vmatprep.subr.mxu0 0.0
    %120 = vmatpush1.xpose.msra.mxu0 0.0
    %121 = vmatprep.subr.mxu0 0.0
    %122 = vmatpush1.xpose.msra.mxu0 0.0
    %123 = vmatprep.subr.mxu0 0.0
    %124 = vmatpush1.xpose.msra.mxu0 0.0
    %125 = vmatprep.subr.mxu0 0.0
    %126 = vmatpush1.xpose.msra.mxu0 0.0
    %127 = vmatprep.subr.mxu0 0.0
    %128 = vmatpush1.xpose.msra.mxu0 0.0
    %129 = vmatprep.subr.mxu0 0.0
    %130 = vmatpush1.xpose.msra.mxu0 0.0
    %131 = vmatprep.subr.mxu0 0.0
    %132 = vmatpush1.xpose.msra.mxu0 0.0
    %133 = vmatprep.subr.mxu0 0.0
    %134 = vmatpush1.xpose.msra.mxu0 0.0
    %135 = vmatprep.mubr.f32.mxu0 0.0
    %136 = vmatmul.mubr.f32.gmra.mrb[0].mxu0 %v54
    %v137 = vpop.f32.mrb[0].mxu0
    %v138 = vadd.f32 %v35, %v137
    %v139 = vpop.f32.mrb[0].mxu0
    %140 = vmatprep.mubr.f32.mxu0 0.0
    %141 = vmatmul.mubr.f32.gmra.mrb[0].mxu0 %v57
    %v142 = vpop.f32.mrb[0].mxu0
    %v143 = vadd.f32 %v40, %v142
    %v144 = vpop.f32.mrb[0].mxu0
    %145 = vmatprep.mubr.f32.mxu0 0.0
    %146 = vmatmul.mubr.f32.gmra.mrb[0].mxu0 %v60
    %v147 = vpop.f32.mrb[0].mxu0
    %v148 = vadd.f32 %v45, %v147
    %v149 = vpop.f32.mrb[0].mxu0
    %150 = vmatprep.mubr.f32.mxu0 0.0
    %151 = vmatmul.mubr.f32.gmra.mrb[0].mxu0 %v63
    %v152 = vpop.f32.mrb[0].mxu0
    %v153 = vadd.f32 %v50, %v152
    %v154 = vpop.f32.mrb[0].mxu0
    %155 = vdwg.mxu0
    %v156 = vtanh.pop %v138
    %v157 = vtanh.pop %v143
    %v158 = vtanh.pop %v148
    %v159 = vtanh.pop %v153
    %v160 = vld [vmem:[%s3] sm:$0xff]
    %v161 = vld [vmem:[%s3 + $0x8] sm:$0xff]
    %v162 = vld [vmem:[%s3 + $0x10] sm:$0xff]
    %v163 = vld [vmem:[%s3 + $0x18] sm:$0xff]
    %165 = vset.pattern.permute.xlu0 0
    %166 = vperm.xlu0 %165, %v160
    %v167 = vpop.permute.xlu0 %166
    %170 = vset.pattern.permute.xlu0 0
    %171 = vperm.xlu0 %170, %v161
    %v172 = vpop.permute.xlu0 %171
    %175 = vset.pattern.permute.xlu0 0
    %176 = vperm.xlu0 %175, %v162
    %v177 = vpop.permute.xlu0 %176
    %180 = vset.pattern.permute.xlu0 0
    %181 = vperm.xlu0 %180, %v163
    %v182 = vpop.permute.xlu0 %181
    %v184 = vmul.f32 %v156, %v167
    %v185 = vmul.f32 %v157, %v172
    %v186 = vmul.f32 %v158, %v177
    %v187 = vmul.f32 %v159, %v182
    %vm188 = vcmask 130048
    %v189 = vsel %vm188, %v184, 0.0
    %v190 = vsel %vm188, %v185, 0.0
    %v191 = vadd.f32 %v189, %v190
    %v192 = vsel %vm188, %v186, 0.0
    %v193 = vadd.f32 %v191, %v192
    %v194 = vsel %vm188, %v187, 0.0
    %v195 = vadd.f32 %v193, %v194
    %v196 = vrot.slane %v195, 4
    %v197 = vadd.f32 %v195, %v196
    %v198 = vrot.slane %v197, 2
    %v199 = vadd.f32 %v197, %v198
    %v200 = vrot.slane %v199, 1
    %v201 = vadd.f32 %v199, %v200
    %s202 = sld [smem:[#allocation2]]
    %v203 = vstv %s202
    %v204 = vadd.f32 %v201, %v203
    %vm205 = vcmask 122880
    %206 = vst.msk [vmem:[#allocation3] sm:$0x1] %vm205, %v204
    // Predicated region
    $region22: #{tpu_custom_call.1} parent=1 // pred_check
      _
    $region23: #{tpu_custom_call.1} parent=1 // pred_check_branch
      %208 = sbr.rel (0) target = $region25
    $region24: #{tpu_custom_call.1} parent=1 // pred_region
      %s210 = ssub.s32 16, 16
      %211 = vsyncadd [#allocation4], %s210
      %s213 = sshll.u32 [#allocation3], 4
      %s214 = int_to_ptr.vmem [resolvable:$true] %s213
      %216 = dma.vmem_to_hbm [thread:$0]  %s214, 16, %s5, [#allocation4]
    $region25: #{tpu_custom_call.1} parent=1 // pred_fallthru
      _
    // Predicated region
    $region26: #{tpu_custom_call.1} parent=1 // pred_check
      _
    $region27: #{tpu_custom_call.1} parent=1 // pred_check_branch
      %218 = sbr.rel (0) target = $region29
    $region28: #{tpu_custom_call.1} parent=1 // pred_region
      %219 = dma.done [#allocation4], 16
    $region29: #{tpu_custom_call.1} parent=1 // pred_fallthru
      _
    %220 = vsyncpa [#allocation4], 1

</llo_original>
